<compile_context>
chip_gen: v7x
topology: tpu7x:2x2x1
jax: 0.10.0
libtpu: 0.0.40
codegen_flags: <defaults>
</compile_context>

<pallas_src>
import jax
import jax.numpy as jnp
from jax.experimental import pallas as pl
from jax.experimental.pallas import tpu as pltpu


_VMEM_SPEC = pl.BlockSpec(memory_space=pltpu.MemorySpace.VMEM)
_FUSED_VMEM_BUDGET = 48 << 20      # above this estimate, use the row-tiled path


# ------------------------------- small helpers ------------------------------

def _round_up(x, m):
    return ((x + m - 1) // m) * m


def _nbytes(arrays):
    return sum(int(a.size) * a.dtype.itemsize for a in arrays)


def _vmem_limit(nbytes):
    # 2x operand footprint + 16 MiB headroom, clamped to [32 MiB, 64 MiB]
    # (64 MiB == v7x physical VMEM; v5e/v6e have 128 MiB so this is safe).
    return max(32 << 20, min(2 * int(nbytes) + (16 << 20), 64 << 20))


class _WeightPack:
    """Packs many small [r, c] f32 weights into one 2-D VMEM-friendly buffer.

    Rows of each entry are padded to a multiple of 8 (sublane) and the buffer
    width to a multiple of 128 (lane), so in-kernel reads are static, aligned
    ref slices.  One packed buffer == one HBM->VMEM DMA for all parameters.
    """

    def __init__(self):
        self._arrays = []
        self._row = 0
        self._max_cols = 1

    def add(self, arr):
        arr = jnp.asarray(arr, jnp.float32)
        if arr.ndim == 1:
            arr = arr[None, :]
        r, c = arr.shape
        entry = (self._row, int(r), int(c))
        self._arrays.append(arr)
        self._row += _round_up(r, 8)
        self._max_cols = max(self._max_cols, int(c))
        return entry

    def pack(self):
        cols = _round_up(self._max_cols, 128)
        rows = max(self._row, 8)
        buf = jnp.zeros((rows, cols), jnp.float32)
        off = 0
        for a in self._arrays:
            buf = buf.at[off:off + a.shape[0], :a.shape[1]].set(a)
            off += _round_up(a.shape[0], 8)
        return buf


# --------------------------- fused (VMEM-resident) kernel -------------------

def _make_fused_kernel(plan):
    """Fused GraphSAGE forward: (convs +) GCN head + pool + MLP + predictor."""
    dt = plan["matmul_dtype"]

    def dot(a, b):
        return jnp.dot(a.astype(dt), b.astype(dt),
                       preferred_element_type=jnp.float32)

    def kernel(*refs):
        it = iter(refs[:-1])
        o_ref = refs[-1]
        if plan["has_gcn"]:
            if plan["conv"]:
                adj_ref = next(it)              # [N, N]  bf16 edge counts
                dinv_ref = next(it)             # [N, 1]  exact f32 1/deg
            pool_ref = next(it)                 # [B, N]  bf16 one-hot
            gsize_ref = next(it)                # [B, 1]  exact f32 1/|graph|
            x_ref = next(it)                    # [N, F]  node features
        if plan["mlp"]:
            mol_ref = next(it)                  # [B, F_mol]
        w_ref = next(it)                        # packed weights / biases

        def getw(entry):
            r0, r, c = entry
            return w_ref[r0:r0 + r, :c]         # static, aligned VMEM slice

        # ------------------------------ GCN branch --------------------------
        h1 = None
        if plan["has_gcn"]:
            h = x_ref[...]
            if plan["conv"]:
                adj = adj_ref[...].astype(dt)   # cast hoisted out of the loop
                deg_inv = dinv_ref[...]
                for (w_e, b_e, f_out, lane_off) in plan["conv"]:
                    w = getw(w_e)               # [f_in, lane_off+f_out] = [W_l|0|W_r]
                    hw = dot(h, w)              # one MXU matmul, both halves
                    neigh = jnp.dot(adj, hw[:, :f_out].astype(dt),
                                    preferred_element_type=jnp.float32) * deg_inv
                    # SAGEConv: lin_l(mean_j x_j) + lin_r(x_i); no inter-conv ReLU
                    h = neigh + hw[:, lane_off:lane_off + f_out] + getw(b_e)
            # GCN head Linear + ReLU, then fused global_mean_pool as a matmul.
            w_e, b_e = plan["gcn_head"]
            h = jnp.maximum(dot(h, getw(w_e)) + getw(b_e), 0.0)
            pooled = jnp.dot(pool_ref[...].astype(dt), h.astype(dt),
                             preferred_element_type=jnp.float32)
            h1 = pooled * gsize_ref[...]

        # ------------------------------ MLP branch --------------------------
        h2 = None
        if plan["mlp"]:
            h = mol_ref[...]
            for (w_e, b_e) in plan["mlp"]:
                h = jnp.maximum(dot(h, getw(w_e)) + getw(b_e), 0.0)
            h2 = h

        # -------------------- concat + predictor + output head --------------
        if plan["split_head"] is not None:
            # cat([h1, h2], dim=1) @ W0 as a split-weight dual matmul.
            wa_e, wb_e, b_e, do_relu = plan["split_head"]
            h = dot(h1, getw(wa_e)) + dot(h2, getw(wb_e)) + getw(b_e)
            if do_relu:
                h = jnp.maximum(h, 0.0)
        else:
            h = h1 if h1 is not None else h2
        for (w_e, b_e, do_relu) in plan["head"]:
            h = dot(h, getw(w_e)) + getw(b_e)
            if do_relu:
                h = jnp.maximum(h, 0.0)

        o_ref[...] = h                          # only HBM write: (B_pad, 1)

    return kernel


# ----------------------- row-tiled SAGEConv (large graphs) ------------------

def _make_conv_kernel(tile_n, f_out, dt):
    def kernel(adj_ref, dinv_ref, h_ref, wl_ref, wr_ref, b_ref, o_ref):
        r0 = pl.multiple_of(pl.program_id(0) * tile_n, tile_n)
        adj = adj_ref[...].astype(dt)                             # [tile_n, N]
        ah = jnp.dot(adj, h_ref[...].astype(dt),
                     preferred_element_type=jnp.float32)          # [tile_n, f_in]
        neigh = jnp.dot(ah.astype(dt), wl_ref[...].astype(dt),
                        preferred_element_type=jnp.float32) * dinv_ref[...]
        root = jnp.dot(h_ref[pl.ds(r0, tile_n), :].astype(dt),
                       wr_ref[...].astype(dt),
                       preferred_element_type=jnp.float32)
        o_ref[...] = neigh + root + b_ref[...]
    return kernel


def _sage_conv_row_tiled(adj_cnt, deg_inv, h, w_l, w_r, b, *, tile_n, dt):
    n_pad, f_in = h.shape
    f_out = int(w_l.shape[1])
    # Per-iteration working set: double-buffered adjacency tiles dominate.
    work_set = (2 * tile_n * n_pad * adj_cnt.dtype.itemsize
                + 2 * _nbytes((h, w_l, w_r, b))
                + 2 * tile_n * (f_in + f_out + 1) * 4)
    return pl.pallas_call(
        _make_conv_kernel(tile_n, f_out, dt),
        out_shape=jax.ShapeDtypeStruct((n_pad, f_out), jnp.float32),
        grid=(n_pad // tile_n,),
        in_specs=[
            pl.BlockSpec((tile_n, n_pad), lambda r: (r, 0)),   # streamed adj rows
            pl.BlockSpec((tile_n, 1), lambda r: (r, 0)),       # 1/deg rows
            pl.BlockSpec((n_pad, f_in), lambda r: (0, 0)),     # H resident (same block)
            pl.BlockSpec((f_in, f_out), lambda r: (0, 0)),
            pl.BlockSpec((f_in, f_out), lambda r: (0, 0)),
            pl.BlockSpec((1, f_out), lambda r: (0, 0)),
        ],
        out_specs=pl.BlockSpec((tile_n, f_out), lambda r: (r, 0)),
        compiler_params=pltpu.CompilerParams(
            dimension_semantics=("parallel",),                 # both v7x TensorCores
            vmem_limit_bytes=_vmem_limit(work_set)),
    )(adj_cnt, deg_inv, h, w_l, w_r, b)


# ------------------------------- parameters ---------------------------------

def init_params(key,
                n_gcn_inputs, n_gcn_hiddens, n_gcn_layers, n_gcn_outputs,
                n_mlp_inputs, n_mlp_hiddens, n_mlp_layers, n_mlp_outputs,
                n_predictor_hiddens, n_predictor_layers):
    """Deterministic synthetic parameters.  Weights stored as [in, out]."""
    assert n_gcn_outputs > 0 or n_mlp_outputs > 0

    def dense(k, f_in, f_out, with_bias=True):
        kw, kb = jax.random.split(k)
        w = 0.1 * jax.random.normal(kw, (f_in, f_out), jnp.float32)
        b = (0.1 * jax.random.normal(kb, (1, f_out), jnp.float32)
             if with_bias else None)
        return w, b

    keys = iter(jax.random.split(key, 64))
    params = {"conv": [], "gcn_lin": None, "mlp": [], "pred": [],
              "n_gcn_outputs": n_gcn_outputs, "n_mlp_outputs": n_mlp_outputs}

    if n_gcn_outputs > 0:
        dims = [n_gcn_inputs] + [n_gcn_hiddens] * n_gcn_layers
        for f_in, f_out in zip(dims[:-1], dims[1:]):
            w_l, b_l = dense(next(keys), f_in, f_out)                  # lin_l (neighbours, bias)
            w_r, _ = dense(next(keys), f_in, f_out, with_bias=False)   # lin_r (root, no bias)
            params["conv"].append((w_l, w_r, b_l))
        params["gcn_lin"] = dense(next(keys), n_gcn_hiddens, n_gcn_outputs)

    if n_mlp_outputs > 0:
        dims = [n_mlp_inputs] + [n_mlp_hiddens] * n_mlp_layers + [n_mlp_outputs]
        for f_in, f_out in zip(dims[:-1], dims[1:]):
            params["mlp"].append(dense(next(keys), f_in, f_out))

    pred_in = n_gcn_outputs + n_mlp_outputs
    if n_predictor_layers > 0:
        dims = [pred_in] + [n_predictor_hiddens] * n_predictor_layers
        for f_in, f_out in zip(dims[:-1], dims[1:]):
            params["pred"].append(dense(next(keys), f_in, f_out))
        params["out"] = dense(next(keys), n_predictor_hiddens, 1)
    else:
        params["out"] = dense(next(keys), pred_in, 1)

    return params


# ------------------------------ forward pass --------------------------------

def _graph_operands(x, edge_index, batch_index, n_pad, b_pad, adj_dtype):
    """Dense mean-aggregation adjacency + mean-pool matrix (padded, low-prec).

    Edge counts / one-hot entries are exact in bf16; the 1/deg and 1/|graph|
    scales stay in f32 and are applied post-matmul inside the kernel.
    NOTE: for a static graph these arrays can be computed once and cached.
    """
    n_nodes = x.shape[0]
    src, dst = edge_index[0], edge_index[1]
    adj_cnt = jnp.zeros((n_pad, n_pad), jnp.float32).at[dst, src].add(1.0)
    deg_inv = 1.0 / jnp.maximum(adj_cnt.sum(axis=1, keepdims=True), 1.0)
    onehot = (batch_index[None, :] ==
              jnp.arange(b_pad, dtype=batch_index.dtype)[:, None])
    onehot = jnp.pad(onehot.astype(jnp.float32), ((0, 0), (0, n_pad - n_nodes)))
    gsize_inv = 1.0 / jnp.maximum(onehot.sum(axis=1, keepdims=True), 1.0)
    x_pad = jnp.pad(x.astype(jnp.float32), ((0, n_pad - n_nodes), (0, 0)))
    return (adj_cnt.astype(adj_dtype), deg_inv, onehot.astype(adj_dtype),
            gsize_inv, x_pad)


def forward(params, x, edge_index, batch_index, mol_features, num_graphs, *,
            matmul_dtype=jnp.bfloat16, adj_dtype=jnp.bfloat16,
            row_tile=None, force_row_tiled=False):
    has_gcn = params["gcn_lin"] is not None
    has_mlp = len(params["mlp"]) > 0
    n_convs = len(params["conv"]) if has_gcn else 0
    n_gcn_out = params["n_gcn_outputs"]
    n_nodes = x.shape[0]
    b_pad = _round_up(max(int(num_graphs), 1), 8)

    # ---- path selection: fully VMEM-resident fused kernel vs. row-tiled convs.
    use_tiled = False
    tile_n = None
    n_pad = _round_up(n_nodes, 8)
    if has_gcn and n_convs > 0:
        adj_bytes = n_pad * n_pad * jnp.dtype(adj_dtype).itemsize
        resident_est = int(2.5 * adj_bytes) + (4 << 20)
        use_tiled = force_row_tiled or resident_est > _FUSED_VMEM_BUDGET
        if use_tiled:
            tile_n = _round_up(max(8, row_tile or 256), 8)
            n_pad = _round_up(n_nodes, tile_n)
            tile_n = min(tile_n, n_pad)

    # ---- host-side graph glue (cacheable per graph).
    if has_gcn:
        adj_cnt, deg_inv, pool, gsize_inv, x_pad = _graph_operands(
            x, edge_index, batch_index, n_pad, b_pad, adj_dtype)
    mol_pad = None
    if has_mlp:
        mol_pad = jnp.pad(mol_features.astype(jnp.float32),
                          ((0, b_pad - num_graphs), (0, 0)))

    # ---- pack every small weight / bias into ONE buffer; build the layer plan.
    wp = _WeightPack()
    conv_plan = []            # fused path: packed fused [W_l | 0 | W_r] per layer
    conv_ops = []             # tiled path: raw per-layer operands
    if has_gcn and n_convs > 0:
        for (w_l, w_r, b) in params["conv"]:
            if use_tiled:
                conv_ops.append((w_l, w_r, b))
            else:
                f_out = int(w_l.shape[1])
                lane_off = _round_up(f_out, 128)      # root half lane-aligned
                w_fused = (jnp.zeros((w_l.shape[0], lane_off + f_out), jnp.float32)
                           .at[:, :f_out].set(w_l)
                           .at[:, lane_off:].set(w_r))
                conv_plan.append((wp.add(w_fused), wp.add(b), f_out, lane_off))
    gcn_head_entry = None
    if has_gcn:
        gw, gb = params["gcn_lin"]
        gcn_head_entry = (wp.add(gw), wp.add(gb))
    mlp_entries = [(wp.add(w), wp.add(b)) for (w, b) in params["mlp"]]
    head_layers = list(params["pred"]) + [params["out"]]
    relu_flags = [True] * len(params["pred"]) + [False]
    split_entry = None
    if has_gcn and has_mlp:
        w0, b0 = head_layers[0]
        split_entry = (wp.add(w0[:n_gcn_out, :]), wp.add(w0[n_gcn_out:, :]),
                       wp.add(b0), relu_flags[0])
        head_layers, relu_flags = head_layers[1:], relu_flags[1:]
    head_entries = [(wp.add(w), wp.add(b), f)
                    for (w, b), f in zip(head_layers, relu_flags)]
    wbuf = wp.pack()

    # ---- row-tiled conv stage (one pipelined, megacore-parallel call / layer).
    h_nodes = None
    if use_tiled:
        h_nodes = x_pad
        for (w_l, w_r, b) in conv_ops:
            h_nodes = _sage_conv_row_tiled(adj_cnt, deg_inv, h_nodes, w_l, w_r, b,
                                           tile_n=tile_n, dt=matmul_dtype)

    # ---- single fused kernel for (convs +) head / pool / MLP / predictor.
    plan = dict(matmul_dtype=matmul_dtype, has_gcn=has_gcn,
                conv=conv_plan, gcn_head=gcn_head_entry, mlp=mlp_entries,
                split_head=split_entry, head=head_entries)
    operands = []
    if has_gcn:
        if conv_plan:
            operands += [adj_cnt, deg_inv]
        operands += [pool, gsize_inv, h_nodes if use_tiled else x_pad]
    if has_mlp:
        operands += [mol_pad]
    operands += [wbuf]

    out = pl.pallas_call(
        _make_fused_kernel(plan),
        out_shape=jax.ShapeDtypeStruct((b_pad, 1), jnp.float32),
        in_specs=[_VMEM_SPEC] * len(operands),     # whole-array, single-buffered
        out_specs=_VMEM_SPEC,
        compiler_params=pltpu.CompilerParams(
            vmem_limit_bytes=_vmem_limit(_nbytes(operands))),
    )(*operands)
    return out[:num_graphs]


# ---------------------------------- main -------------------------------------

if __name__ == "__main__":
    # Small hyper-parameters consistent with the module's __init__ signature.
    n_gcn_inputs, n_gcn_hiddens, n_gcn_layers, n_gcn_outputs = 8, 32, 2, 16
    n_mlp_inputs, n_mlp_hiddens, n_mlp_layers, n_mlp_outputs = 8, 32, 2, 16
    n_predictor_hiddens, n_predictor_layers = 32, 2

    num_graphs = 2
    nodes_per_graph = 8
    n_nodes = num_graphs * nodes_per_graph

    key = jax.random.PRNGKey(0)
    k_params, k_x, k_mol = jax.random.split(key, 3)

    params = init_params(
        k_params,
        n_gcn_inputs, n_gcn_hiddens, n_gcn_layers, n_gcn_outputs,
        n_mlp_inputs, n_mlp_hiddens, n_mlp_layers, n_mlp_outputs,
        n_predictor_hiddens, n_predictor_layers)

    # Node features, per-graph bidirectional ring edges, batch assignment.
    x = jax.random.normal(k_x, (n_nodes, n_gcn_inputs), jnp.float32)
    edges = []
    for g in range(num_graphs):
        base = g * nodes_per_graph
        for i in range(nodes_per_graph):
            j = (i + 1) % nodes_per_graph
            edges.append((base + i, base + j))
            edges.append((base + j, base + i))
    edge_index = jnp.array(edges, dtype=jnp.int32).T            # [2, E]
    batch_index = jnp.repeat(jnp.arange(num_graphs, dtype=jnp.int32),
                             nodes_per_graph)                    # [N]
    mol_features = jax.random.normal(k_mol, (num_graphs, n_mlp_inputs),
                                     jnp.float32)                # [B, F_mol]

    # Fully VMEM-resident fused path (small / medium graphs).
    out = forward(params, x, edge_index, batch_index, mol_features, num_graphs)
    out = jax.block_until_ready(out)
    assert out.shape == (num_graphs, 1)
    assert bool(jnp.all(jnp.isfinite(out)))

    # Row-tiled adjacency path (large-graph / v7x code path), forced at a tiny
    # tile so it is exercised here; must agree with the fused path.
    out_tiled = forward(params, x, edge_index, batch_index, mol_features,
                        num_graphs, force_row_tiled=True, row_tile=8)
    out_tiled = jax.block_until_ready(out_tiled)
    assert out_tiled.shape == (num_graphs, 1)
    assert bool(jnp.allclose(out, out_tiled, atol=5e-2, rtol=5e-2))

    print("KERNEL_OK")
</pallas_src>

<mosaic_0001>
module attributes {stable_mosaic.version = 11 : i64} {
  func.func @kernel(%arg0: memref<16x16xbf16, #tpu.memory_space<vmem>>, %arg1: memref<16x1xf32, #tpu.memory_space<vmem>>, %arg2: memref<8x16xbf16, #tpu.memory_space<vmem>>, %arg3: memref<8x1xf32, #tpu.memory_space<vmem>>, %arg4: memref<16x8xf32, #tpu.memory_space<vmem>>, %arg5: memref<8x8xf32, #tpu.memory_space<vmem>>, %arg6: memref<312x256xf32, #tpu.memory_space<vmem>>, %arg7: memref<8x1xf32, #tpu.memory_space<vmem>>) attributes {dimension_semantics = [], scalar_prefetch = 0 : i64, scratch_operands = 0 : i64, tpu.core_type = #tpu.core_type<tc>} {
    %c0 = arith.constant 0 : index
    %c0_0 = arith.constant 0 : index
    %0 = vector.load %arg4[%c0, %c0_0] : memref<16x8xf32, #tpu.memory_space<vmem>>, vector<16x8xf32>
    %c0_1 = arith.constant 0 : index
    %c0_2 = arith.constant 0 : index
    %1 = vector.load %arg0[%c0_1, %c0_2] : memref<16x16xbf16, #tpu.memory_space<vmem>>, vector<16x16xbf16>
    %c0_3 = arith.constant 0 : index
    %c0_4 = arith.constant 0 : index
    %2 = vector.load %arg1[%c0_3, %c0_4] : memref<16x1xf32, #tpu.memory_space<vmem>>, vector<16x1xf32>
    %c0_5 = arith.constant 0 : index
    %c0_6 = arith.constant 0 : index
    %3 = vector.load %arg6[%c0_5, %c0_6] : memref<312x256xf32, #tpu.memory_space<vmem>>, vector<8x160xf32>
    %4 = arith.truncf %0 : vector<16x8xf32> to vector<16x8xbf16>
    %5 = arith.truncf %3 : vector<8x160xf32> to vector<8x160xbf16>
    %cst = arith.constant dense<0.000000e+00> : vector<16x160xf32>
    %6 = tpu.matmul %4, %5, %cst {dimension_numbers = #tpu.dot_dimension_numbers<[1], [0], [0], [1], [0, 0, 1, 1], [], []>} : vector<16x8xbf16>, vector<8x160xbf16>, vector<16x160xf32> -> vector<16x160xf32>
    %7 = vector.extract_strided_slice %6 {offsets = [0, 0], sizes = [16, 32], strides = [1, 1]} : vector<16x160xf32> to vector<16x32xf32>
    %8 = arith.truncf %7 : vector<16x32xf32> to vector<16x32xbf16>
    %cst_7 = arith.constant dense<0.000000e+00> : vector<16x32xf32>
    %9 = tpu.matmul %1, %8, %cst_7 {dimension_numbers = #tpu.dot_dimension_numbers<[1], [0], [0], [1], [0, 0, 1, 1], [], []>} : vector<16x16xbf16>, vector<16x32xbf16>, vector<16x32xf32> -> vector<16x32xf32>
    %10 = vector.broadcast %2 : vector<16x1xf32> to vector<16x32xf32>
    %11 = arith.mulf %9, %10 : vector<16x32xf32>
    %12 = vector.extract_strided_slice %6 {offsets = [0, 128], sizes = [16, 32], strides = [1, 1]} : vector<16x160xf32> to vector<16x32xf32>
    %13 = arith.addf %11, %12 : vector<16x32xf32>
    %c8 = arith.constant 8 : index
    %c0_8 = arith.constant 0 : index
    %14 = vector.load %arg6[%c8, %c0_8] : memref<312x256xf32, #tpu.memory_space<vmem>>, vector<1x32xf32>
    %15 = vector.broadcast %14 : vector<1x32xf32> to vector<16x32xf32>
    %16 = arith.addf %13, %15 : vector<16x32xf32>
    %c16 = arith.constant 16 : index
    %c0_9 = arith.constant 0 : index
    %17 = vector.load %arg6[%c16, %c0_9] : memref<312x256xf32, #tpu.memory_space<vmem>>, vector<32x160xf32>
    %18 = arith.truncf %16 : vector<16x32xf32> to vector<16x32xbf16>
    %19 = arith.truncf %17 : vector<32x160xf32> to vector<32x160xbf16>
    %cst_10 = arith.constant dense<0.000000e+00> : vector<16x160xf32>
    %20 = tpu.matmul %18, %19, %cst_10 {dimension_numbers = #tpu.dot_dimension_numbers<[1], [0], [0], [1], [0, 0, 1, 1], [], []>} : vector<16x32xbf16>, vector<32x160xbf16>, vector<16x160xf32> -> vector<16x160xf32>
    %21 = vector.extract_strided_slice %20 {offsets = [0, 0], sizes = [16, 32], strides = [1, 1]} : vector<16x160xf32> to vector<16x32xf32>
    %22 = arith.truncf %21 : vector<16x32xf32> to vector<16x32xbf16>
    %cst_11 = arith.constant dense<0.000000e+00> : vector<16x32xf32>
    %23 = tpu.matmul %1, %22, %cst_11 {dimension_numbers = #tpu.dot_dimension_numbers<[1], [0], [0], [1], [0, 0, 1, 1], [], []>} : vector<16x16xbf16>, vector<16x32xbf16>, vector<16x32xf32> -> vector<16x32xf32>
    %24 = vector.broadcast %2 : vector<16x1xf32> to vector<16x32xf32>
    %25 = arith.mulf %23, %24 : vector<16x32xf32>
    %26 = vector.extract_strided_slice %20 {offsets = [0, 128], sizes = [16, 32], strides = [1, 1]} : vector<16x160xf32> to vector<16x32xf32>
    %27 = arith.addf %25, %26 : vector<16x32xf32>
    %c48 = arith.constant 48 : index
    %c0_12 = arith.constant 0 : index
    %28 = vector.load %arg6[%c48, %c0_12] : memref<312x256xf32, #tpu.memory_space<vmem>>, vector<1x32xf32>
    %29 = vector.broadcast %28 : vector<1x32xf32> to vector<16x32xf32>
    %30 = arith.addf %27, %29 : vector<16x32xf32>
    %c56 = arith.constant 56 : index
    %c0_13 = arith.constant 0 : index
    %31 = vector.load %arg6[%c56, %c0_13] : memref<312x256xf32, #tpu.memory_space<vmem>>, vector<32x16xf32>
    %32 = arith.truncf %30 : vector<16x32xf32> to vector<16x32xbf16>
    %33 = arith.truncf %31 : vector<32x16xf32> to vector<32x16xbf16>
    %cst_14 = arith.constant dense<0.000000e+00> : vector<16x16xf32>
    %34 = tpu.matmul %32, %33, %cst_14 {dimension_numbers = #tpu.dot_dimension_numbers<[1], [0], [0], [1], [0, 0, 1, 1], [], []>} : vector<16x32xbf16>, vector<32x16xbf16>, vector<16x16xf32> -> vector<16x16xf32>
    %c88 = arith.constant 88 : index
    %c0_15 = arith.constant 0 : index
    %35 = vector.load %arg6[%c88, %c0_15] : memref<312x256xf32, #tpu.memory_space<vmem>>, vector<1x16xf32>
    %36 = vector.broadcast %35 : vector<1x16xf32> to vector<16x16xf32>
    %37 = arith.addf %34, %36 : vector<16x16xf32>
    %cst_16 = arith.constant 0.000000e+00 : f32
    %38 = vector.broadcast %cst_16 : f32 to vector<16x16xf32>
    %39 = arith.maximumf %37, %38 : vector<16x16xf32>
    %c0_17 = arith.constant 0 : index
    %c0_18 = arith.constant 0 : index
    %40 = vector.load %arg2[%c0_17, %c0_18] : memref<8x16xbf16, #tpu.memory_space<vmem>>, vector<8x16xbf16>
    %41 = arith.truncf %39 : vector<16x16xf32> to vector<16x16xbf16>
    %cst_19 = arith.constant dense<0.000000e+00> : vector<8x16xf32>
    %42 = tpu.matmul %40, %41, %cst_19 {dimension_numbers = #tpu.dot_dimension_numbers<[1], [0], [0], [1], [0, 0, 1, 1], [], []>} : vector<8x16xbf16>, vector<16x16xbf16>, vector<8x16xf32> -> vector<8x16xf32>
    %c0_20 = arith.constant 0 : index
    %c0_21 = arith.constant 0 : index
    %43 = vector.load %arg3[%c0_20, %c0_21] : memref<8x1xf32, #tpu.memory_space<vmem>>, vector<8x1xf32>
    %44 = vector.broadcast %43 : vector<8x1xf32> to vector<8x16xf32>
    %45 = arith.mulf %42, %44 : vector<8x16xf32>
    %c0_22 = arith.constant 0 : index
    %c0_23 = arith.constant 0 : index
    %46 = vector.load %arg5[%c0_22, %c0_23] : memref<8x8xf32, #tpu.memory_space<vmem>>, vector<8x8xf32>
    %c96 = arith.constant 96 : index
    %c0_24 = arith.constant 0 : index
    %47 = vector.load %arg6[%c96, %c0_24] : memref<312x256xf32, #tpu.memory_space<vmem>>, vector<8x32xf32>
    %48 = arith.truncf %46 : vector<8x8xf32> to vector<8x8xbf16>
    %49 = arith.truncf %47 : vector<8x32xf32> to vector<8x32xbf16>
    %cst_25 = arith.constant dense<0.000000e+00> : vector<8x32xf32>
    %50 = tpu.matmul %48, %49, %cst_25 {dimension_numbers = #tpu.dot_dimension_numbers<[1], [0], [0], [1], [0, 0, 1, 1], [], []>} : vector<8x8xbf16>, vector<8x32xbf16>, vector<8x32xf32> -> vector<8x32xf32>
    %c104 = arith.constant 104 : index
    %c0_26 = arith.constant 0 : index
    %51 = vector.load %arg6[%c104, %c0_26] : memref<312x256xf32, #tpu.memory_space<vmem>>, vector<1x32xf32>
    %52 = vector.broadcast %51 : vector<1x32xf32> to vector<8x32xf32>
    %53 = arith.addf %50, %52 : vector<8x32xf32>
    %cst_27 = arith.constant 0.000000e+00 : f32
    %54 = vector.broadcast %cst_27 : f32 to vector<8x32xf32>
    %55 = arith.maximumf %53, %54 : vector<8x32xf32>
    %c112 = arith.constant 112 : index
    %c0_28 = arith.constant 0 : index
    %56 = vector.load %arg6[%c112, %c0_28] : memref<312x256xf32, #tpu.memory_space<vmem>>, vector<32x32xf32>
    %57 = arith.truncf %55 : vector<8x32xf32> to vector<8x32xbf16>
    %58 = arith.truncf %56 : vector<32x32xf32> to vector<32x32xbf16>
    %cst_29 = arith.constant dense<0.000000e+00> : vector<8x32xf32>
    %59 = tpu.matmul %57, %58, %cst_29 {dimension_numbers = #tpu.dot_dimension_numbers<[1], [0], [0], [1], [0, 0, 1, 1], [], []>} : vector<8x32xbf16>, vector<32x32xbf16>, vector<8x32xf32> -> vector<8x32xf32>
    %c144 = arith.constant 144 : index
    %c0_30 = arith.constant 0 : index
    %60 = vector.load %arg6[%c144, %c0_30] : memref<312x256xf32, #tpu.memory_space<vmem>>, vector<1x32xf32>
    %61 = vector.broadcast %60 : vector<1x32xf32> to vector<8x32xf32>
    %62 = arith.addf %59, %61 : vector<8x32xf32>
    %cst_31 = arith.constant 0.000000e+00 : f32
    %63 = vector.broadcast %cst_31 : f32 to vector<8x32xf32>
    %64 = arith.maximumf %62, %63 : vector<8x32xf32>
    %c152 = arith.constant 152 : index
    %c0_32 = arith.constant 0 : index
    %65 = vector.load %arg6[%c152, %c0_32] : memref<312x256xf32, #tpu.memory_space<vmem>>, vector<32x16xf32>
    %66 = arith.truncf %64 : vector<8x32xf32> to vector<8x32xbf16>
    %67 = arith.truncf %65 : vector<32x16xf32> to vector<32x16xbf16>
    %cst_33 = arith.constant dense<0.000000e+00> : vector<8x16xf32>
    %68 = tpu.matmul %66, %67, %cst_33 {dimension_numbers = #tpu.dot_dimension_numbers<[1], [0], [0], [1], [0, 0, 1, 1], [], []>} : vector<8x32xbf16>, vector<32x16xbf16>, vector<8x16xf32> -> vector<8x16xf32>
    %c184 = arith.constant 184 : index
    %c0_34 = arith.constant 0 : index
    %69 = vector.load %arg6[%c184, %c0_34] : memref<312x256xf32, #tpu.memory_space<vmem>>, vector<1x16xf32>
    %70 = vector.broadcast %69 : vector<1x16xf32> to vector<8x16xf32>
    %71 = arith.addf %68, %70 : vector<8x16xf32>
    %cst_35 = arith.constant 0.000000e+00 : f32
    %72 = vector.broadcast %cst_35 : f32 to vector<8x16xf32>
    %73 = arith.maximumf %71, %72 : vector<8x16xf32>
    %c192 = arith.constant 192 : index
    %c0_36 = arith.constant 0 : index
    %74 = vector.load %arg6[%c192, %c0_36] : memref<312x256xf32, #tpu.memory_space<vmem>>, vector<16x32xf32>
    %75 = arith.truncf %45 : vector<8x16xf32> to vector<8x16xbf16>
    %76 = arith.truncf %74 : vector<16x32xf32> to vector<16x32xbf16>
    %cst_37 = arith.constant dense<0.000000e+00> : vector<8x32xf32>
    %77 = tpu.matmul %75, %76, %cst_37 {dimension_numbers = #tpu.dot_dimension_numbers<[1], [0], [0], [1], [0, 0, 1, 1], [], []>} : vector<8x16xbf16>, vector<16x32xbf16>, vector<8x32xf32> -> vector<8x32xf32>
    %c208 = arith.constant 208 : index
    %c0_38 = arith.constant 0 : index
    %78 = vector.load %arg6[%c208, %c0_38] : memref<312x256xf32, #tpu.memory_space<vmem>>, vector<16x32xf32>
    %79 = arith.truncf %73 : vector<8x16xf32> to vector<8x16xbf16>
    %80 = arith.truncf %78 : vector<16x32xf32> to vector<16x32xbf16>
    %cst_39 = arith.constant dense<0.000000e+00> : vector<8x32xf32>
    %81 = tpu.matmul %79, %80, %cst_39 {dimension_numbers = #tpu.dot_dimension_numbers<[1], [0], [0], [1], [0, 0, 1, 1], [], []>} : vector<8x16xbf16>, vector<16x32xbf16>, vector<8x32xf32> -> vector<8x32xf32>
    %82 = arith.addf %77, %81 : vector<8x32xf32>
    %c224 = arith.constant 224 : index
    %c0_40 = arith.constant 0 : index
    %83 = vector.load %arg6[%c224, %c0_40] : memref<312x256xf32, #tpu.memory_space<vmem>>, vector<1x32xf32>
    %84 = vector.broadcast %83 : vector<1x32xf32> to vector<8x32xf32>
    %85 = arith.addf %82, %84 : vector<8x32xf32>
    %cst_41 = arith.constant 0.000000e+00 : f32
    %86 = vector.broadcast %cst_41 : f32 to vector<8x32xf32>
    %87 = arith.maximumf %85, %86 : vector<8x32xf32>
    %c232 = arith.constant 232 : index
    %c0_42 = arith.constant 0 : index
    %88 = vector.load %arg6[%c232, %c0_42] : memref<312x256xf32, #tpu.memory_space<vmem>>, vector<32x32xf32>
    %89 = arith.truncf %87 : vector<8x32xf32> to vector<8x32xbf16>
    %90 = arith.truncf %88 : vector<32x32xf32> to vector<32x32xbf16>
    %cst_43 = arith.constant dense<0.000000e+00> : vector<8x32xf32>
    %91 = tpu.matmul %89, %90, %cst_43 {dimension_numbers = #tpu.dot_dimension_numbers<[1], [0], [0], [1], [0, 0, 1, 1], [], []>} : vector<8x32xbf16>, vector<32x32xbf16>, vector<8x32xf32> -> vector<8x32xf32>
    %c264 = arith.constant 264 : index
    %c0_44 = arith.constant 0 : index
    %92 = vector.load %arg6[%c264, %c0_44] : memref<312x256xf32, #tpu.memory_space<vmem>>, vector<1x32xf32>
    %93 = vector.broadcast %92 : vector<1x32xf32> to vector<8x32xf32>
    %94 = arith.addf %91, %93 : vector<8x32xf32>
    %cst_45 = arith.constant 0.000000e+00 : f32
    %95 = vector.broadcast %cst_45 : f32 to vector<8x32xf32>
    %96 = arith.maximumf %94, %95 : vector<8x32xf32>
    %c272 = arith.constant 272 : index
    %c0_46 = arith.constant 0 : index
    %97 = vector.load %arg6[%c272, %c0_46] : memref<312x256xf32, #tpu.memory_space<vmem>>, vector<32x1xf32>
    %98 = arith.truncf %96 : vector<8x32xf32> to vector<8x32xbf16>
    %99 = arith.truncf %97 : vector<32x1xf32> to vector<32x1xbf16>
    %cst_47 = arith.constant dense<0.000000e+00> : vector<8x1xf32>
    %100 = tpu.matmul %98, %99, %cst_47 {dimension_numbers = #tpu.dot_dimension_numbers<[1], [0], [0], [1], [0, 0, 1, 1], [], []>} : vector<8x32xbf16>, vector<32x1xbf16>, vector<8x1xf32> -> vector<8x1xf32>
    %c304 = arith.constant 304 : index
    %c0_48 = arith.constant 0 : index
    %101 = vector.load %arg6[%c304, %c0_48] : memref<312x256xf32, #tpu.memory_space<vmem>>, vector<1x1xf32>
    %102 = vector.broadcast %101 : vector<1x1xf32> to vector<8x1xf32>
    %103 = arith.addf %100, %102 : vector<8x1xf32>
    %c0_49 = arith.constant 0 : index
    %c0_50 = arith.constant 0 : index
    %104 = vector.load %arg7[%c0_49, %c0_50] : memref<8x1xf32, #tpu.memory_space<vmem>>, vector<8x1xf32>
    tpu.vector_store %arg7[%c0_49, %c0_50], %103 {strides = array<i32>} : memref<8x1xf32, #tpu.memory_space<vmem>>, vector<8x1xf32>,
    return
  }
}

</mosaic_0001>

<llo_original>
// kernel: tpu_custom_call.1
$region0: #{tpu_custom_call.1}
  #allocation0 [shape = 'u32[]', space=smem, size = 0x4, offset = 0x4, fixed_abs, tag = 'smem constant byte address 0x4 - core index']
  #allocation1 [shape = 'u32[144,128]{1,0:T(1,128)}', space=vmem, size = 0x12000, scoped, tag = 'internal scratch']
  %s0 = inlined_call_operand.vmem [shape: bf16[16,16], index: 0, kind: input, shape index: {}]
  %s1 = inlined_call_operand.vmem [shape: f32[16,1], index: 1, kind: input, shape index: {}]
  %s2 = inlined_call_operand.vmem [shape: bf16[8,16], index: 2, kind: input, shape index: {}]
  %s3 = inlined_call_operand.vmem [shape: f32[8,1], index: 3, kind: input, shape index: {}]
  %s4 = inlined_call_operand.vmem [shape: f32[16,8], index: 4, kind: input, shape index: {}]
  %s5 = inlined_call_operand.vmem [shape: f32[8,8], index: 5, kind: input, shape index: {}]
  %s6 = inlined_call_operand.hbm [shape: f32[312,256], index: 6, kind: input, shape index: {}]
  %s7 = inlined_call_operand.vmem [shape: f32[8,1], index: 7, kind: output, shape index: {}]
  %s8 = sld [smem:[#allocation0]]
  $region42: #{tpu_custom_call.1} parent=0
    _
  %s10 = ssub.s32 1, %s8
  %s11 = scalar_select 0, %s10, %s8
  $region1: #{tpu_custom_call.1} parent=0
    #allocation2 [shape = 'u8[319488]{0}', space=vmem, size = 0x4e000, scoped, tag = 'input window, operand 6, single buffered']
    #allocation3 [shape = 's32[1]{0}', space=sflag, size = 0x4, scoped, tag = 'scoped memory for tpu_custom_call.1']
    %12 = vsyncpa [#allocation3], 0
    // Predicated region
    $region2: #{tpu_custom_call.1} parent=1 // pred_check
      _
    $region3: #{tpu_custom_call.1} parent=1 // pred_check_branch
      %14 = sbr.rel (0) target = $region5
    $region4: #{tpu_custom_call.1} parent=1 // pred_region
      _
    $region5: #{tpu_custom_call.1} parent=1 // pred_fallthru
      _
    // Predicated region
    $region6: #{tpu_custom_call.1} parent=1 // pred_check
      _
    $region7: #{tpu_custom_call.1} parent=1 // pred_check_branch
      %16 = sbr.rel (0) target = $region9
    $region8: #{tpu_custom_call.1} parent=1 // pred_region
      _
    $region9: #{tpu_custom_call.1} parent=1 // pred_fallthru
      _
    // Predicated region
    $region10: #{tpu_custom_call.1} parent=1 // pred_check
      _
    $region11: #{tpu_custom_call.1} parent=1 // pred_check_branch
      %18 = sbr.rel (0) target = $region13
    $region12: #{tpu_custom_call.1} parent=1 // pred_region
      _
    $region13: #{tpu_custom_call.1} parent=1 // pred_fallthru
      _
    // Predicated region
    $region14: #{tpu_custom_call.1} parent=1 // pred_check
      _
    $region15: #{tpu_custom_call.1} parent=1 // pred_check_branch
      %20 = sbr.rel (0) target = $region17
    $region16: #{tpu_custom_call.1} parent=1 // pred_region
      _
    $region17: #{tpu_custom_call.1} parent=1 // pred_fallthru
      _
    // Predicated region
    $region18: #{tpu_custom_call.1} parent=1 // pred_check
      _
    $region19: #{tpu_custom_call.1} parent=1 // pred_check_branch
      %22 = sbr.rel (0) target = $region21
    $region20: #{tpu_custom_call.1} parent=1 // pred_region
      _
    $region21: #{tpu_custom_call.1} parent=1 // pred_fallthru
      _
    // Predicated region
    $region22: #{tpu_custom_call.1} parent=1 // pred_check
      _
    $region23: #{tpu_custom_call.1} parent=1 // pred_check_branch
      %24 = sbr.rel (0) target = $region25
    $region24: #{tpu_custom_call.1} parent=1 // pred_region
      _
    $region25: #{tpu_custom_call.1} parent=1 // pred_fallthru
      _
    // Predicated region
    $region26: #{tpu_custom_call.1} parent=1 // pred_check
      _
    $region27: #{tpu_custom_call.1} parent=1 // pred_check_branch
      %26 = sbr.rel (0) target = $region29
    $region28: #{tpu_custom_call.1} parent=1 // pred_region
      %s28 = ssub.s32 9984, 9984
      %29 = vsyncadd [#allocation3], %s28
      %s30 = sshll.u32 [#allocation2], 4
      %s31 = int_to_ptr.vmem [resolvable:$true] %s30
      %36 = dma.hbm_to_vmem [thread:$0]  %s6, 9984, %s31, [#allocation3], 256, 256, 16
    $region29: #{tpu_custom_call.1} parent=1 // pred_fallthru
      _
    // Predicated region
    $region30: #{tpu_custom_call.1} parent=1 // pred_check
      _
    $region31: #{tpu_custom_call.1} parent=1 // pred_check_branch
      %38 = sbr.rel (0) target = $region33
    $region32: #{tpu_custom_call.1} parent=1 // pred_region
      %39 = dma.done [#allocation3], 9984
    $region33: #{tpu_custom_call.1} parent=1 // pred_fallthru
      _
    %v41 = vld [vmem:[%s4] sm:$0xff]
    %v42 = vld [vmem:[%s4 + $0x8] sm:$0xff]
    %v43 = vld [vmem:[%s0] sm:$0xf]
    %v44 = vld [vmem:[%s0 + $0x4] sm:$0xf]
    %v45 = vld [vmem:[%s1] sm:$0xff]
    %v46 = vld [vmem:[%s1 + $0x8] sm:$0xff]
    %v47 = vld [vmem:[#allocation2] sm:$0xff]
    %v48 = vld [vmem:[#allocation2 + $0x8] sm:$0xff]
    %v49 = vpack.c.bf16 %v42, %v41
    %v50 = vpack.c.bf16 %v47, %v47
    %v51 = vpack.c.bf16 %v48, %v48
    %vm52 = vcmask 64512
    %v54 = vsel %vm52, %v49, 0
    %vm56 = vcmask 1043456
    %v58 = vsel %vm56, %v50, 0
    %v61 = vsel %vm56, %v51, 0
    %63 = vmatprep.subr.bf16.mxu0 %v61
    %64 = vmatpush1.bf16.msra.mxu0 %v58
    %65 = vmatprep.subr.bf16.mxu0 0
    %66 = vmatpush1.bf16.msra.mxu0 0
    %67 = vmatprep.subr.bf16.mxu0 0
    %68 = vmatpush1.bf16.msra.mxu0 0
    %69 = vmatprep.subr.bf16.mxu0 0
    %70 = vmatpush1.bf16.msra.mxu0 0
    %71 = vmatprep.subr.bf16.mxu0 0
    %72 = vmatpush1.bf16.msra.mxu0 0
    %73 = vmatprep.subr.bf16.mxu0 0
    %74 = vmatpush1.bf16.msra.mxu0 0
    %75 = vmatprep.subr.bf16.mxu0 0
    %76 = vmatpush1.bf16.msra.mxu0 0
    %77 = vmatprep.subr.bf16.mxu0 0
    %78 = vmatpush1.bf16.msra.mxu0 0
    %79 = vmatprep.subr.bf16.mxu0 0
    %80 = vmatpush1.bf16.msra.mxu0 0
    %81 = vmatprep.subr.bf16.mxu0 0
    %82 = vmatpush1.bf16.msra.mxu0 0
    %83 = vmatprep.subr.bf16.mxu0 0
    %84 = vmatpush1.bf16.msra.mxu0 0
    %85 = vmatprep.subr.bf16.mxu0 0
    %86 = vmatpush1.bf16.msra.mxu0 0
    %87 = vmatprep.subr.bf16.mxu0 0
    %88 = vmatpush1.bf16.msra.mxu0 0
    %89 = vmatprep.subr.bf16.mxu0 0
    %90 = vmatpush1.bf16.msra.mxu0 0
    %91 = vmatprep.subr.bf16.mxu0 0
    %92 = vmatpush1.bf16.msra.mxu0 0
    %93 = vmatprep.subr.bf16.mxu0 0
    %94 = vmatpush1.bf16.msra.mxu0 0
    %95 = vmatprep.mubr.bf16.mxu0 0
    %96 = vmatmul.mubr.bf16.gmra.mrb[0].mxu0 %v54
    %v97 = vpop.f32.mrb[0].mxu0
    %v98 = vadd.f32 0.0, %v97
    %v99 = vpop.f32.mrb[0].mxu0
    %v100 = vadd.f32 0.0, %v99
    %v101 = vpop.f32.mrb[0].mxu0
    %v102 = vadd.f32 0.0, %v101
    %v103 = vpop.f32.mrb[0].mxu0
    %v104 = vadd.f32 0.0, %v103
    %105 = vdwg.mxu0
    %v106 = vpack.c.bf16 %v102, %v98
    %v109 = vunpack.c.l.b16 %v43
    %v110 = vunpack.c.l.b16 %v44
    %v111 = vpack.c.b16 %v110, %v109
    %vm112 = vcmask 130048
    %v114 = vsel %vm112, %v111, 0
    %116 = vmatprep.subr.bf16.mxu0 0
    %117 = vmatpush1.bf16.msra.mxu0 %v106
    %118 = vmatprep.subr.bf16.mxu0 0
    %119 = vmatpush1.bf16.msra.mxu0 0
    %120 = vmatprep.subr.bf16.mxu0 0
    %121 = vmatpush1.bf16.msra.mxu0 0
    %122 = vmatprep.subr.bf16.mxu0 0
    %123 = vmatpush1.bf16.msra.mxu0 0
    %124 = vmatprep.subr.bf16.mxu0 0
    %125 = vmatpush1.bf16.msra.mxu0 0
    %126 = vmatprep.subr.bf16.mxu0 0
    %127 = vmatpush1.bf16.msra.mxu0 0
    %128 = vmatprep.subr.bf16.mxu0 0
    %129 = vmatpush1.bf16.msra.mxu0 0
    %130 = vmatprep.subr.bf16.mxu0 0
    %131 = vmatpush1.bf16.msra.mxu0 0
    %132 = vmatprep.subr.bf16.mxu0 0
    %133 = vmatpush1.bf16.msra.mxu0 0
    %134 = vmatprep.subr.bf16.mxu0 0
    %135 = vmatpush1.bf16.msra.mxu0 0
    %136 = vmatprep.subr.bf16.mxu0 0
    %137 = vmatpush1.bf16.msra.mxu0 0
    %138 = vmatprep.subr.bf16.mxu0 0
    %139 = vmatpush1.bf16.msra.mxu0 0
    %140 = vmatprep.subr.bf16.mxu0 0
    %141 = vmatpush1.bf16.msra.mxu0 0
    %142 = vmatprep.subr.bf16.mxu0 0
    %143 = vmatpush1.bf16.msra.mxu0 0
    %144 = vmatprep.subr.bf16.mxu0 0
    %145 = vmatpush1.bf16.msra.mxu0 0
    %146 = vmatprep.subr.bf16.mxu0 0
    %147 = vmatpush1.bf16.msra.mxu0 0
    %148 = vmatprep.mubr.bf16.mxu0 0
    %149 = vmatmul.mubr.bf16.gmra.mrb[0].mxu0 %v114
    %v150 = vpop.f32.mrb[0].mxu0
    %v151 = vadd.f32 0.0, %v150
    %v152 = vpop.f32.mrb[0].mxu0
    %v153 = vpop.f32.mrb[0].mxu0
    %v154 = vadd.f32 0.0, %v153
    %v155 = vpop.f32.mrb[0].mxu0
    %156 = vdwg.mxu0
    %158 = vset.pattern.permute.xlu0 0
    %159 = vperm.xlu0 %158, %v45
    %v160 = vpop.permute.xlu0 %159
    %163 = vset.pattern.permute.xlu0 0
    %164 = vperm.xlu0 %163, %v46
    %v165 = vpop.permute.xlu0 %164
    %v167 = vmul.f32 %v151, %v160
    %v168 = vmul.f32 %v154, %v165
    %v169 = vadd.f32 %v167, %v100
    %v170 = vadd.f32 %v168, %v104
    %v171 = vld [vmem:[#allocation2 + $0x10] ss:$0 sm:$0xff]
    %v172 = vadd.f32 %v169, %v171
    %v173 = vadd.f32 %v170, %v171
    %v174 = vld [vmem:[#allocation2 + $0x20] sm:$0xff]
    %v175 = vld [vmem:[#allocation2 + $0x28] sm:$0xff]
    %v176 = vld [vmem:[#allocation2 + $0x30] sm:$0xff]
    %v177 = vld [vmem:[#allocation2 + $0x38] sm:$0xff]
    %v178 = vld [vmem:[#allocation2 + $0x40] sm:$0xff]
    %v179 = vld [vmem:[#allocation2 + $0x48] sm:$0xff]
    %v180 = vld [vmem:[#allocation2 + $0x50] sm:$0xff]
    %v181 = vld [vmem:[#allocation2 + $0x58] sm:$0xff]
    %v182 = vpack.c.bf16 %v173, %v172
    %v183 = vpack.c.bf16 %v176, %v174
    %v184 = vpack.c.bf16 %v177, %v175
    %v185 = vpack.c.bf16 %v180, %v178
    %v186 = vpack.c.bf16 %v181, %v179
    %vm187 = vcmask 261120
    %v189 = vsel %vm187, %v182, 0
    %191 = vmatprep.subr.bf16.mxu0 %v184
    %192 = vmatpush1.bf16.msra.mxu0 %v183
    %193 = vmatprep.subr.bf16.mxu0 %v186
    %194 = vmatpush1.bf16.msra.mxu0 %v185
    %195 = vmatprep.subr.bf16.mxu0 0
    %196 = vmatpush1.bf16.msra.mxu0 0
    %197 = vmatprep.subr.bf16.mxu0 0
    %198 = vmatpush1.bf16.msra.mxu0 0
    %199 = vmatprep.subr.bf16.mxu0 0
    %200 = vmatpush1.bf16.msra.mxu0 0
    %201 = vmatprep.subr.bf16.mxu0 0
    %202 = vmatpush1.bf16.msra.mxu0 0
    %203 = vmatprep.subr.bf16.mxu0 0
    %204 = vmatpush1.bf16.msra.mxu0 0
    %205 = vmatprep.subr.bf16.mxu0 0
    %206 = vmatpush1.bf16.msra.mxu0 0
    %207 = vmatprep.subr.bf16.mxu0 0
    %208 = vmatpush1.bf16.msra.mxu0 0
    %209 = vmatprep.subr.bf16.mxu0 0
    %210 = vmatpush1.bf16.msra.mxu0 0
    %211 = vmatprep.subr.bf16.mxu0 0
    %212 = vmatpush1.bf16.msra.mxu0 0
    %213 = vmatprep.subr.bf16.mxu0 0
    %214 = vmatpush1.bf16.msra.mxu0 0
    %215 = vmatprep.subr.bf16.mxu0 0
    %216 = vmatpush1.bf16.msra.mxu0 0
    %217 = vmatprep.subr.bf16.mxu0 0
    %218 = vmatpush1.bf16.msra.mxu0 0
    %219 = vmatprep.subr.bf16.mxu0 0
    %220 = vmatpush1.bf16.msra.mxu0 0
    %221 = vmatprep.subr.bf16.mxu0 0
    %222 = vmatpush1.bf16.msra.mxu0 0
    %223 = vmatprep.mubr.bf16.mxu0 0
    %224 = vmatmul.mubr.bf16.gmra.mrb[0].mxu0 %v189
    %v225 = vpop.f32.mrb[0].mxu0
    %v226 = vadd.f32 0.0, %v225
    %v227 = vpop.f32.mrb[0].mxu0
    %v228 = vadd.f32 0.0, %v227
    %v229 = vpop.f32.mrb[0].mxu0
    %v230 = vadd.f32 0.0, %v229
    %v231 = vpop.f32.mrb[0].mxu0
    %v232 = vadd.f32 0.0, %v231
    %233 = vdwg.mxu0
    %v234 = vpack.c.bf16 %v230, %v226
    %235 = vmatprep.subr.bf16.mxu0 0
    %236 = vmatpush1.bf16.msra.mxu0 %v234
    %237 = vmatprep.subr.bf16.mxu0 0
    %238 = vmatpush1.bf16.msra.mxu0 0
    %239 = vmatprep.subr.bf16.mxu0 0
    %240 = vmatpush1.bf16.msra.mxu0 0
    %241 = vmatprep.subr.bf16.mxu0 0
    %242 = vmatpush1.bf16.msra.mxu0 0
    %243 = vmatprep.subr.bf16.mxu0 0
    %244 = vmatpush1.bf16.msra.mxu0 0
    %245 = vmatprep.subr.bf16.mxu0 0
    %246 = vmatpush1.bf16.msra.mxu0 0
    %247 = vmatprep.subr.bf16.mxu0 0
    %248 = vmatpush1.bf16.msra.mxu0 0
    %249 = vmatprep.subr.bf16.mxu0 0
    %250 = vmatpush1.bf16.msra.mxu0 0
    %251 = vmatprep.subr.bf16.mxu0 0
    %252 = vmatpush1.bf16.msra.mxu0 0
    %253 = vmatprep.subr.bf16.mxu0 0
    %254 = vmatpush1.bf16.msra.mxu0 0
    %255 = vmatprep.subr.bf16.mxu0 0
    %256 = vmatpush1.bf16.msra.mxu0 0
    %257 = vmatprep.subr.bf16.mxu0 0
    %258 = vmatpush1.bf16.msra.mxu0 0
    %259 = vmatprep.subr.bf16.mxu0 0
    %260 = vmatpush1.bf16.msra.mxu0 0
    %261 = vmatprep.subr.bf16.mxu0 0
    %262 = vmatpush1.bf16.msra.mxu0 0
    %263 = vmatprep.subr.bf16.mxu0 0
    %264 = vmatpush1.bf16.msra.mxu0 0
    %265 = vmatprep.subr.bf16.mxu0 0
    %266 = vmatpush1.bf16.msra.mxu0 0
    %267 = vmatprep.mubr.bf16.mxu0 0
    %268 = vmatmul.mubr.bf16.gmra.mrb[0].mxu0 %v114
    %v269 = vpop.f32.mrb[0].mxu0
    %v270 = vadd.f32 0.0, %v269
    %v271 = vpop.f32.mrb[0].mxu0
    %v272 = vpop.f32.mrb[0].mxu0
    %v273 = vadd.f32 0.0, %v272
    %v274 = vpop.f32.mrb[0].mxu0
    %275 = vdwg.mxu0
    %v276 = vmul.f32 %v270, %v160
    %v277 = vmul.f32 %v273, %v165
    %v278 = vadd.f32 %v276, %v228
    %v279 = vadd.f32 %v277, %v232
    %v280 = vld [vmem:[#allocation2 + $0x60] ss:$0 sm:$0xff]
    %v281 = vadd.f32 %v278, %v280
    %v282 = vadd.f32 %v279, %v280
    %v283 = vld [vmem:[#allocation2 + $0x70] sm:$0xff]
    %v284 = vld [vmem:[#allocation2 + $0x80] sm:$0xff]
    %v285 = vld [vmem:[#allocation2 + $0x90] sm:$0xff]
    %v286 = vld [vmem:[#allocation2 + $0xa0] sm:$0xff]
    %v287 = vpack.c.bf16 %v282, %v281
    %v288 = vpack.c.bf16 %v284, %v283
    %v289 = vpack.c.bf16 %v286, %v285
    %v290 = vld [vmem:[#allocation2 + $0xb0] ss:$0 sm:$0xff]
    %v292 = vsel %vm187, %v287, 0
    %294 = vmatprep.subr.bf16.mxu0 0
    %295 = vmatpush1.bf16.msra.mxu0 %v288
    %296 = vmatprep.subr.bf16.mxu0 0
    %297 = vmatpush1.bf16.msra.mxu0 %v289
    %298 = vmatprep.subr.bf16.mxu0 0
    %299 = vmatpush1.bf16.msra.mxu0 0
    %300 = vmatprep.subr.bf16.mxu0 0
    %301 = vmatpush1.bf16.msra.mxu0 0
    %302 = vmatprep.subr.bf16.mxu0 0
    %303 = vmatpush1.bf16.msra.mxu0 0
    %304 = vmatprep.subr.bf16.mxu0 0
    %305 = vmatpush1.bf16.msra.mxu0 0
    %306 = vmatprep.subr.bf16.mxu0 0
    %307 = vmatpush1.bf16.msra.mxu0 0
    %308 = vmatprep.subr.bf16.mxu0 0
    %309 = vmatpush1.bf16.msra.mxu0 0
    %310 = vmatprep.subr.bf16.mxu0 0
    %311 = vmatpush1.bf16.msra.mxu0 0
    %312 = vmatprep.subr.bf16.mxu0 0
    %313 = vmatpush1.bf16.msra.mxu0 0
    %314 = vmatprep.subr.bf16.mxu0 0
    %315 = vmatpush1.bf16.msra.mxu0 0
    %316 = vmatprep.subr.bf16.mxu0 0
    %317 = vmatpush1.bf16.msra.mxu0 0
    %318 = vmatprep.subr.bf16.mxu0 0
    %319 = vmatpush1.bf16.msra.mxu0 0
    %320 = vmatprep.subr.bf16.mxu0 0
    %321 = vmatpush1.bf16.msra.mxu0 0
    %322 = vmatprep.subr.bf16.mxu0 0
    %323 = vmatpush1.bf16.msra.mxu0 0
    %324 = vmatprep.subr.bf16.mxu0 0
    %325 = vmatpush1.bf16.msra.mxu0 0
    %326 = vmatprep.mubr.bf16.mxu0 0
    %327 = vmatmul.mubr.bf16.gmra.mrb[0].mxu0 %v292
    %v328 = vpop.f32.mrb[0].mxu0
    %v329 = vadd.f32 %v290, %v328
    %v330 = vpop.f32.mrb[0].mxu0
    %v331 = vpop.f32.mrb[0].mxu0
    %v332 = vadd.f32 %v290, %v331
    %v333 = vpop.f32.mrb[0].mxu0
    %334 = vdwg.mxu0
    %v335 = vmax.f32 %v329, 0.0
    %v336 = vmax.f32 %v332, 0.0
    %v337 = vld [vmem:[%s2] sm:$0xf]
    %v338 = vpack.c.bf16 %v336, %v335
    %v340 = vsel %vm112, %v337, 0
    %342 = vmatprep.subr.bf16.mxu0 0
    %343 = vmatpush1.bf16.msra.mxu0 %v338
    %344 = vmatprep.subr.bf16.mxu0 0
    %345 = vmatpush1.bf16.msra.mxu0 0
    %346 = vmatprep.subr.bf16.mxu0 0
    %347 = vmatpush1.bf16.msra.mxu0 0
    %348 = vmatprep.subr.bf16.mxu0 0
    %349 = vmatpush1.bf16.msra.mxu0 0
    %350 = vmatprep.subr.bf16.mxu0 0
    %351 = vmatpush1.bf16.msra.mxu0 0
    %352 = vmatprep.subr.bf16.mxu0 0
    %353 = vmatpush1.bf16.msra.mxu0 0
    %354 = vmatprep.subr.bf16.mxu0 0
    %355 = vmatpush1.bf16.msra.mxu0 0
    %356 = vmatprep.subr.bf16.mxu0 0
    %357 = vmatpush1.bf16.msra.mxu0 0
    %358 = vmatprep.subr.bf16.mxu0 0
    %359 = vmatpush1.bf16.msra.mxu0 0
    %360 = vmatprep.subr.bf16.mxu0 0
    %361 = vmatpush1.bf16.msra.mxu0 0
    %362 = vmatprep.subr.bf16.mxu0 0
    %363 = vmatpush1.bf16.msra.mxu0 0
    %364 = vmatprep.subr.bf16.mxu0 0
    %365 = vmatpush1.bf16.msra.mxu0 0
    %366 = vmatprep.subr.bf16.mxu0 0
    %367 = vmatpush1.bf16.msra.mxu0 0
    %368 = vmatprep.subr.bf16.mxu0 0
    %369 = vmatpush1.bf16.msra.mxu0 0
    %370 = vmatprep.subr.bf16.mxu0 0
    %371 = vmatpush1.bf16.msra.mxu0 0
    %372 = vmatprep.subr.bf16.mxu0 0
    %373 = vmatpush1.bf16.msra.mxu0 0
    %374 = vmatprep.mubr.bf16.mxu0 0
    %375 = vmatmul.mubr.bf16.gmra.mrb[0].mxu0 %v340
    %v376 = vpop.f32.mrb[0].mxu0
    %v377 = vadd.f32 0.0, %v376
    %v378 = vpop.f32.mrb[0].mxu0
    %v379 = vpop.f32.mrb[0].mxu0
    %v380 = vpop.f32.mrb[0].mxu0
    %381 = vdwg.mxu0
    %v382 = vld [vmem:[%s3] sm:$0xff]
    %384 = vset.pattern.permute.xlu0 0
    %385 = vperm.xlu0 %384, %v382
    %v386 = vpop.permute.xlu0 %385
    %v388 = vmul.f32 %v377, %v386
    %v389 = vld [vmem:[%s5] sm:$0xff]
    %v390 = vld [vmem:[#allocation2 + $0xc0] sm:$0xff]
    %v391 = vpack.c.bf16 %v389, %v389
    %v392 = vpack.c.bf16 %v390, %v390
    %v393 = vld [vmem:[#allocation2 + $0xd0] ss:$0 sm:$0xff]
    %v395 = vsel %vm52, %v391, 0
    %v398 = vsel %vm56, %v392, 0
    %400 = vmatprep.subr.bf16.mxu0 0
    %401 = vmatpush1.bf16.msra.mxu0 %v398
    %402 = vmatprep.subr.bf16.mxu0 0
    %403 = vmatpush1.bf16.msra.mxu0 0
    %404 = vmatprep.subr.bf16.mxu0 0
    %405 = vmatpush1.bf16.msra.mxu0 0
    %406 = vmatprep.subr.bf16.mxu0 0
    %407 = vmatpush1.bf16.msra.mxu0 0
    %408 = vmatprep.subr.bf16.mxu0 0
    %409 = vmatpush1.bf16.msra.mxu0 0
    %410 = vmatprep.subr.bf16.mxu0 0
    %411 = vmatpush1.bf16.msra.mxu0 0
    %412 = vmatprep.subr.bf16.mxu0 0
    %413 = vmatpush1.bf16.msra.mxu0 0
    %414 = vmatprep.subr.bf16.mxu0 0
    %415 = vmatpush1.bf16.msra.mxu0 0
    %416 = vmatprep.subr.bf16.mxu0 0
    %417 = vmatpush1.bf16.msra.mxu0 0
    %418 = vmatprep.subr.bf16.mxu0 0
    %419 = vmatpush1.bf16.msra.mxu0 0
    %420 = vmatprep.subr.bf16.mxu0 0
    %421 = vmatpush1.bf16.msra.mxu0 0
    %422 = vmatprep.subr.bf16.mxu0 0
    %423 = vmatpush1.bf16.msra.mxu0 0
    %424 = vmatprep.subr.bf16.mxu0 0
    %425 = vmatpush1.bf16.msra.mxu0 0
    %426 = vmatprep.subr.bf16.mxu0 0
    %427 = vmatpush1.bf16.msra.mxu0 0
    %428 = vmatprep.subr.bf16.mxu0 0
    %429 = vmatpush1.bf16.msra.mxu0 0
    %430 = vmatprep.subr.bf16.mxu0 0
    %431 = vmatpush1.bf16.msra.mxu0 0
    %432 = vmatprep.mubr.bf16.mxu0 0
    %433 = vmatmul.mubr.bf16.gmra.mrb[0].mxu0 %v395
    %v434 = vpop.f32.mrb[0].mxu0
    %v435 = vadd.f32 %v393, %v434
    %v436 = vpop.f32.mrb[0].mxu0
    %v437 = vpop.f32.mrb[0].mxu0
    %v438 = vpop.f32.mrb[0].mxu0
    %439 = vdwg.mxu0
    %v440 = vmax.f32 %v435, 0.0
    %v441 = vld [vmem:[#allocation2 + $0xe0] sm:$0xff]
    %v442 = vld [vmem:[#allocation2 + $0xf0] sm:$0xff]
    %v443 = vld [vmem:[#allocation2 + $0x100] sm:$0xff]
    %v444 = vld [vmem:[#allocation2 + $0x110] sm:$0xff]
    %v445 = vpack.c.bf16 %v440, %v440
    %v446 = vpack.c.bf16 %v442, %v441
    %v447 = vpack.c.bf16 %v444, %v443
    %v448 = vld [vmem:[#allocation2 + $0x120] ss:$0 sm:$0xff]
    %v450 = vsel %vm187, %v445, 0
    %452 = vmatprep.subr.bf16.mxu0 0
    %453 = vmatpush1.bf16.msra.mxu0 %v446
    %454 = vmatprep.subr.bf16.mxu0 0
    %455 = vmatpush1.bf16.msra.mxu0 %v447
    %456 = vmatprep.subr.bf16.mxu0 0
    %457 = vmatpush1.bf16.msra.mxu0 0
    %458 = vmatprep.subr.bf16.mxu0 0
    %459 = vmatpush1.bf16.msra.mxu0 0
    %460 = vmatprep.subr.bf16.mxu0 0
    %461 = vmatpush1.bf16.msra.mxu0 0
    %462 = vmatprep.subr.bf16.mxu0 0
    %463 = vmatpush1.bf16.msra.mxu0 0
    %464 = vmatprep.subr.bf16.mxu0 0
    %465 = vmatpush1.bf16.msra.mxu0 0
    %466 = vmatprep.subr.bf16.mxu0 0
    %467 = vmatpush1.bf16.msra.mxu0 0
    %468 = vmatprep.subr.bf16.mxu0 0
    %469 = vmatpush1.bf16.msra.mxu0 0
    %470 = vmatprep.subr.bf16.mxu0 0
    %471 = vmatpush1.bf16.msra.mxu0 0
    %472 = vmatprep.subr.bf16.mxu0 0
    %473 = vmatpush1.bf16.msra.mxu0 0
    %474 = vmatprep.subr.bf16.mxu0 0
    %475 = vmatpush1.bf16.msra.mxu0 0
    %476 = vmatprep.subr.bf16.mxu0 0
    %477 = vmatpush1.bf16.msra.mxu0 0
    %478 = vmatprep.subr.bf16.mxu0 0
    %479 = vmatpush1.bf16.msra.mxu0 0
    %480 = vmatprep.subr.bf16.mxu0 0
    %481 = vmatpush1.bf16.msra.mxu0 0
    %482 = vmatprep.subr.bf16.mxu0 0
    %483 = vmatpush1.bf16.msra.mxu0 0
    %484 = vmatprep.mubr.bf16.mxu0 0
    %485 = vmatmul.mubr.bf16.gmra.mrb[0].mxu0 %v450
    %v486 = vpop.f32.mrb[0].mxu0
    %v487 = vadd.f32 %v448, %v486
    %v488 = vpop.f32.mrb[0].mxu0
    %v489 = vpop.f32.mrb[0].mxu0
    %v490 = vpop.f32.mrb[0].mxu0
    %491 = vdwg.mxu0
    %v492 = vmax.f32 %v487, 0.0
    %v493 = vld [vmem:[#allocation2 + $0x130] sm:$0xff]
    %v494 = vld [vmem:[#allocation2 + $0x140] sm:$0xff]
    %v495 = vld [vmem:[#allocation2 + $0x150] sm:$0xff]
    %v496 = vld [vmem:[#allocation2 + $0x160] sm:$0xff]
    %v497 = vpack.c.bf16 %v492, %v492
    %v498 = vpack.c.bf16 %v494, %v493
    %v499 = vpack.c.bf16 %v496, %v495
    %v500 = vld [vmem:[#allocation2 + $0x170] ss:$0 sm:$0xff]
    %v502 = vsel %vm187, %v497, 0
    %504 = vmatprep.subr.bf16.mxu0 0
    %505 = vmatpush1.bf16.msra.mxu0 %v498
    %506 = vmatprep.subr.bf16.mxu0 0
    %507 = vmatpush1.bf16.msra.mxu0 %v499
    %508 = vmatprep.subr.bf16.mxu0 0
    %509 = vmatpush1.bf16.msra.mxu0 0
    %510 = vmatprep.subr.bf16.mxu0 0
    %511 = vmatpush1.bf16.msra.mxu0 0
    %512 = vmatprep.subr.bf16.mxu0 0
    %513 = vmatpush1.bf16.msra.mxu0 0
    %514 = vmatprep.subr.bf16.mxu0 0
    %515 = vmatpush1.bf16.msra.mxu0 0
    %516 = vmatprep.subr.bf16.mxu0 0
    %517 = vmatpush1.bf16.msra.mxu0 0
    %518 = vmatprep.subr.bf16.mxu0 0
    %519 = vmatpush1.bf16.msra.mxu0 0
    %520 = vmatprep.subr.bf16.mxu0 0
    %521 = vmatpush1.bf16.msra.mxu0 0
    %522 = vmatprep.subr.bf16.mxu0 0
    %523 = vmatpush1.bf16.msra.mxu0 0
    %524 = vmatprep.subr.bf16.mxu0 0
    %525 = vmatpush1.bf16.msra.mxu0 0
    %526 = vmatprep.subr.bf16.mxu0 0
    %527 = vmatpush1.bf16.msra.mxu0 0
    %528 = vmatprep.subr.bf16.mxu0 0
    %529 = vmatpush1.bf16.msra.mxu0 0
    %530 = vmatprep.subr.bf16.mxu0 0
    %531 = vmatpush1.bf16.msra.mxu0 0
    %532 = vmatprep.subr.bf16.mxu0 0
    %533 = vmatpush1.bf16.msra.mxu0 0
    %534 = vmatprep.subr.bf16.mxu0 0
    %535 = vmatpush1.bf16.msra.mxu0 0
    %536 = vmatprep.mubr.bf16.mxu0 0
    %537 = vmatmul.mubr.bf16.gmra.mrb[0].mxu0 %v502
    %v538 = vpop.f32.mrb[0].mxu0
    %v539 = vadd.f32 %v500, %v538
    %v540 = vpop.f32.mrb[0].mxu0
    %v541 = vpop.f32.mrb[0].mxu0
    %v542 = vpop.f32.mrb[0].mxu0
    %543 = vdwg.mxu0
    %v544 = vmax.f32 %v539, 0.0
    %v545 = vld [vmem:[#allocation2 + $0x180] sm:$0xff]
    %v546 = vld [vmem:[#allocation2 + $0x190] sm:$0xff]
    %v547 = vpack.c.bf16 %v388, %v388
    %v548 = vpack.c.bf16 %v546, %v545
    %v549 = vld [vmem:[#allocation2 + $0x1a0] sm:$0xff]
    %v550 = vld [vmem:[#allocation2 + $0x1b0] sm:$0xff]
    %v551 = vpack.c.bf16 %v544, %v544
    %v552 = vpack.c.bf16 %v550, %v549
    %v554 = vsel %vm112, %v551, 0
    %556 = vmatprep.subr.bf16.mxu0 0
    %557 = vmatpush1.bf16.msra.mxu0 %v552
    %558 = vmatprep.subr.bf16.mxu0 0
    %559 = vmatpush1.bf16.msra.mxu0 0
    %560 = vmatprep.subr.bf16.mxu0 0
    %561 = vmatpush1.bf16.msra.mxu0 0
    %562 = vmatprep.subr.bf16.mxu0 0
    %563 = vmatpush1.bf16.msra.mxu0 0
    %564 = vmatprep.subr.bf16.mxu0 0
    %565 = vmatpush1.bf16.msra.mxu0 0
    %566 = vmatprep.subr.bf16.mxu0 0
    %567 = vmatpush1.bf16.msra.mxu0 0
    %568 = vmatprep.subr.bf16.mxu0 0
    %569 = vmatpush1.bf16.msra.mxu0 0
    %570 = vmatprep.subr.bf16.mxu0 0
    %571 = vmatpush1.bf16.msra.mxu0 0
    %572 = vmatprep.subr.bf16.mxu0 0
    %573 = vmatpush1.bf16.msra.mxu0 0
    %574 = vmatprep.subr.bf16.mxu0 0
    %575 = vmatpush1.bf16.msra.mxu0 0
    %576 = vmatprep.subr.bf16.mxu0 0
    %577 = vmatpush1.bf16.msra.mxu0 0
    %578 = vmatprep.subr.bf16.mxu0 0
    %579 = vmatpush1.bf16.msra.mxu0 0
    %580 = vmatprep.subr.bf16.mxu0 0
    %581 = vmatpush1.bf16.msra.mxu0 0
    %582 = vmatprep.subr.bf16.mxu0 0
    %583 = vmatpush1.bf16.msra.mxu0 0
    %584 = vmatprep.subr.bf16.mxu0 0
    %585 = vmatpush1.bf16.msra.mxu0 0
    %586 = vmatprep.subr.bf16.mxu0 0
    %587 = vmatpush1.bf16.msra.mxu0 0
    %588 = vmatprep.mubr.bf16.mxu0 0
    %589 = vmatmul.mubr.bf16.gmra.mrb[0].mxu0 %v554
    %v590 = vpop.f32.mrb[0].mxu0
    %v591 = vadd.f32 0.0, %v590
    %v592 = vpop.f32.mrb[0].mxu0
    %v593 = vpop.f32.mrb[0].mxu0
    %v594 = vpop.f32.mrb[0].mxu0
    %595 = vdwg.mxu0
    %v597 = vsel %vm112, %v547, 0
    %599 = vmatprep.subr.bf16.mxu0 0
    %600 = vmatpush1.bf16.msra.mxu0 %v548
    %601 = vmatprep.subr.bf16.mxu0 0
    %602 = vmatpush1.bf16.msra.mxu0 0
    %603 = vmatprep.subr.bf16.mxu0 0
    %604 = vmatpush1.bf16.msra.mxu0 0
    %605 = vmatprep.subr.bf16.mxu0 0
    %606 = vmatpush1.bf16.msra.mxu0 0
    %607 = vmatprep.subr.bf16.mxu0 0
    %608 = vmatpush1.bf16.msra.mxu0 0
    %609 = vmatprep.subr.bf16.mxu0 0
    %610 = vmatpush1.bf16.msra.mxu0 0
    %611 = vmatprep.subr.bf16.mxu0 0
    %612 = vmatpush1.bf16.msra.mxu0 0
    %613 = vmatprep.subr.bf16.mxu0 0
    %614 = vmatpush1.bf16.msra.mxu0 0
    %615 = vmatprep.subr.bf16.mxu0 0
    %616 = vmatpush1.bf16.msra.mxu0 0
    %617 = vmatprep.subr.bf16.mxu0 0
    %618 = vmatpush1.bf16.msra.mxu0 0
    %619 = vmatprep.subr.bf16.mxu0 0
    %620 = vmatpush1.bf16.msra.mxu0 0
    %621 = vmatprep.subr.bf16.mxu0 0
    %622 = vmatpush1.bf16.msra.mxu0 0
    %623 = vmatprep.subr.bf16.mxu0 0
    %624 = vmatpush1.bf16.msra.mxu0 0
    %625 = vmatprep.subr.bf16.mxu0 0
    %626 = vmatpush1.bf16.msra.mxu0 0
    %627 = vmatprep.subr.bf16.mxu0 0
    %628 = vmatpush1.bf16.msra.mxu0 0
    %629 = vmatprep.subr.bf16.mxu0 0
    %630 = vmatpush1.bf16.msra.mxu0 0
    %631 = vmatprep.mubr.bf16.mxu0 0
    %632 = vmatmul.mubr.bf16.gmra.mrb[0].mxu0 %v597
    %v633 = vpop.f32.mrb[0].mxu0
    %v634 = vadd.f32 %v591, %v633
    %v635 = vpop.f32.mrb[0].mxu0
    %v636 = vpop.f32.mrb[0].mxu0
    %v637 = vpop.f32.mrb[0].mxu0
    %638 = vdwg.mxu0
    %v639 = vld [vmem:[#allocation2 + $0x1c0] ss:$0 sm:$0xff]
    %v640 = vadd.f32 %v634, %v639
    %v641 = vmax.f32 %v640, 0.0
    %v642 = vld [vmem:[#allocation2 + $0x1d0] sm:$0xff]
    %v643 = vld [vmem:[#allocation2 + $0x1e0] sm:$0xff]
    %v644 = vld [vmem:[#allocation2 + $0x1f0] sm:$0xff]
    %v645 = vld [vmem:[#allocation2 + $0x200] sm:$0xff]
    %v646 = vpack.c.bf16 %v641, %v641
    %v647 = vpack.c.bf16 %v643, %v642
    %v648 = vpack.c.bf16 %v645, %v644
    %v649 = vld [vmem:[#allocation2 + $0x210] ss:$0 sm:$0xff]
    %v651 = vsel %vm187, %v646, 0
    %653 = vmatprep.subr.bf16.mxu0 0
    %654 = vmatpush1.bf16.msra.mxu0 %v647
    %655 = vmatprep.subr.bf16.mxu0 0
    %656 = vmatpush1.bf16.msra.mxu0 %v648
    %657 = vmatprep.subr.bf16.mxu0 0
    %658 = vmatpush1.bf16.msra.mxu0 0
    %659 = vmatprep.subr.bf16.mxu0 0
    %660 = vmatpush1.bf16.msra.mxu0 0
    %661 = vmatprep.subr.bf16.mxu0 0
    %662 = vmatpush1.bf16.msra.mxu0 0
    %663 = vmatprep.subr.bf16.mxu0 0
    %664 = vmatpush1.bf16.msra.mxu0 0
    %665 = vmatprep.subr.bf16.mxu0 0
    %666 = vmatpush1.bf16.msra.mxu0 0
    %667 = vmatprep.subr.bf16.mxu0 0
    %668 = vmatpush1.bf16.msra.mxu0 0
    %669 = vmatprep.subr.bf16.mxu0 0
    %670 = vmatpush1.bf16.msra.mxu0 0
    %671 = vmatprep.subr.bf16.mxu0 0
    %672 = vmatpush1.bf16.msra.mxu0 0
    %673 = vmatprep.subr.bf16.mxu0 0
    %674 = vmatpush1.bf16.msra.mxu0 0
    %675 = vmatprep.subr.bf16.mxu0 0
    %676 = vmatpush1.bf16.msra.mxu0 0
    %677 = vmatprep.subr.bf16.mxu0 0
    %678 = vmatpush1.bf16.msra.mxu0 0
    %679 = vmatprep.subr.bf16.mxu0 0
    %680 = vmatpush1.bf16.msra.mxu0 0
    %681 = vmatprep.subr.bf16.mxu0 0
    %682 = vmatpush1.bf16.msra.mxu0 0
    %683 = vmatprep.subr.bf16.mxu0 0
    %684 = vmatpush1.bf16.msra.mxu0 0
    %685 = vmatprep.mubr.bf16.mxu0 0
    %686 = vmatmul.mubr.bf16.gmra.mrb[0].mxu0 %v651
    %v687 = vpop.f32.mrb[0].mxu0
    %v688 = vadd.f32 %v649, %v687
    %v689 = vpop.f32.mrb[0].mxu0
    %v690 = vpop.f32.mrb[0].mxu0
    %v691 = vpop.f32.mrb[0].mxu0
    %692 = vdwg.mxu0
    %v693 = vmax.f32 %v688, 0.0
    %v694 = vld [vmem:[#allocation2 + $0x220] sm:$0xff]
    %v695 = vld [vmem:[#allocation2 + $0x230] sm:$0xff]
    %v696 = vld [vmem:[#allocation2 + $0x240] sm:$0xff]
    %v697 = vld [vmem:[#allocation2 + $0x250] sm:$0xff]
    %v698 = vpack.c.bf16 %v693, %v693
    %v699 = vpack.c.bf16 %v695, %v694
    %v700 = vpack.c.bf16 %v697, %v696
    %v701 = vld [vmem:[#allocation2 + $0x260] ss:$0 sm:$0xff]
    %v703 = vsel %vm187, %v698, 0
    %705 = vmatprep.subr.bf16.mxu0 0
    %706 = vmatpush1.bf16.msra.mxu0 %v699
    %707 = vmatprep.subr.bf16.mxu0 0
    %708 = vmatpush1.bf16.msra.mxu0 %v700
    %709 = vmatprep.subr.bf16.mxu0 0
    %710 = vmatpush1.bf16.msra.mxu0 0
    %711 = vmatprep.subr.bf16.mxu0 0
    %712 = vmatpush1.bf16.msra.mxu0 0
    %713 = vmatprep.subr.bf16.mxu0 0
    %714 = vmatpush1.bf16.msra.mxu0 0
    %715 = vmatprep.subr.bf16.mxu0 0
    %716 = vmatpush1.bf16.msra.mxu0 0
    %717 = vmatprep.subr.bf16.mxu0 0
    %718 = vmatpush1.bf16.msra.mxu0 0
    %719 = vmatprep.subr.bf16.mxu0 0
    %720 = vmatpush1.bf16.msra.mxu0 0
    %721 = vmatprep.subr.bf16.mxu0 0
    %722 = vmatpush1.bf16.msra.mxu0 0
    %723 = vmatprep.subr.bf16.mxu0 0
    %724 = vmatpush1.bf16.msra.mxu0 0
    %725 = vmatprep.subr.bf16.mxu0 0
    %726 = vmatpush1.bf16.msra.mxu0 0
    %727 = vmatprep.subr.bf16.mxu0 0
    %728 = vmatpush1.bf16.msra.mxu0 0
    %729 = vmatprep.subr.bf16.mxu0 0
    %730 = vmatpush1.bf16.msra.mxu0 0
    %731 = vmatprep.subr.bf16.mxu0 0
    %732 = vmatpush1.bf16.msra.mxu0 0
    %733 = vmatprep.subr.bf16.mxu0 0
    %734 = vmatpush1.bf16.msra.mxu0 0
    %735 = vmatprep.subr.bf16.mxu0 0
    %736 = vmatpush1.bf16.msra.mxu0 0
    %737 = vmatprep.mubr.bf16.mxu0 0
    %738 = vmatmul.mubr.bf16.gmra.mrb[0].mxu0 %v703
    %v739 = vpop.f32.mrb[0].mxu0
    %v740 = vadd.f32 %v701, %v739
    %v741 = vpop.f32.mrb[0].mxu0
    %v742 = vpop.f32.mrb[0].mxu0
    %v743 = vpop.f32.mrb[0].mxu0
    %744 = vdwg.mxu0
    %vm745 = vcmask 7168
    %746 = vst.msk [vmem:[%s7] sm:$0xff] %vm745, %v740
    // Predicated region
    $region34: #{tpu_custom_call.1} parent=1 // pred_check
      _
    $region35: #{tpu_custom_call.1} parent=1 // pred_check_branch
      %748 = sbr.rel (0) target = $region37
    $region36: #{tpu_custom_call.1} parent=1 // pred_region
      _
    $region37: #{tpu_custom_call.1} parent=1 // pred_fallthru
      _
    // Predicated region
    $region38: #{tpu_custom_call.1} parent=1 // pred_check
      _
    $region39: #{tpu_custom_call.1} parent=1 // pred_check_branch
      %750 = sbr.rel (0) target = $region41
    $region40: #{tpu_custom_call.1} parent=1 // pred_region
      _
    $region41: #{tpu_custom_call.1} parent=1 // pred_fallthru
      _
    %751 = vsyncpa [#allocation3], 1

</llo_original>
